<compile_context>
chip_gen: v6e
topology: v6e:2x2x1
jax: 0.10.0
libtpu: 0.0.40
codegen_flags: <defaults>
</compile_context>

<pallas_src>
import functools

import jax
import jax.numpy as jnp
from jax import lax
from jax.experimental import pallas as pl
from jax.experimental.pallas import tpu as pltpu


def _ce_label_smooth_kernel(logits_ref, targets_ref, out_ref, *,
                            epsilon, num_classes, batch, block_b, mask_rows):
    x = logits_ref[...].astype(jnp.float32)                  # (TB, K)
    tb, k = x.shape

    # Numerically-stable log-softmax pieces (row-wise).  No lane masking needed:
    # the block's last dim is exactly K.
    m = jnp.max(x, axis=1, keepdims=True)                    # (TB, 1)
    shifted = x - m                                          # (TB, K), <= 0
    lse = jnp.log(jnp.sum(jnp.exp(shifted), axis=1, keepdims=True))   # (TB, 1)

    # Target log-prob and sum of all log-probs without materializing one_hot/smooth.
    tgt = targets_ref[...]                                   # (TB, 1) int32
    class_ids = lax.broadcasted_iota(jnp.int32, (tb, k), 1)
    tgt_shift = jnp.sum(jnp.where(class_ids == tgt, shifted, 0.0),
                        axis=1, keepdims=True)               # (TB, 1)
    sum_shift = jnp.sum(shifted, axis=1, keepdims=True)      # (TB, 1)

    tgt_lp = tgt_shift - lse
    sum_lp = sum_shift - jnp.float32(num_classes) * lse      # sum_k log_probs[k]
    row_loss = (-(1.0 - epsilon)) * tgt_lp - (epsilon / num_classes) * sum_lp

    if mask_rows:
        # Only emitted when the last block is ragged (B % block_b != 0): rows past
        # the true batch size may contain unspecified data from the partial-block
        # DMA; zero their contribution (divide-by-global-B happens in the wrapper).
        i = pl.program_id(0)
        row_ids = i * block_b + lax.broadcasted_iota(jnp.int32, (tb, 1), 0)
        row_loss = jnp.where(row_ids < batch, row_loss, 0.0)

    partial = jnp.sum(row_loss)

    # Lane-dense (1, 1, 128) output block: partial sum in lane 0, zeros elsewhere.
    lane_ids = lax.broadcasted_iota(jnp.int32, (1, 1, 128), 2)
    out_ref[...] = jnp.where(lane_ids == 0, partial, 0.0)


def _round_up(v, m):
    return (v + m - 1) // m * m


def _scoped_vmem_limit_bytes():
    # 128-MiB-VMEM generations (v4 / v5e / v6e) -> 64 MiB scoped limit.
    # v7x (64 MiB physical) or anything we can't identify -> tight 44 MiB.
    try:
        kind = jax.devices()[0].device_kind.lower()
        if any(g in kind for g in ("v4", "v5", "v6")):
            return 64 * 1024 * 1024
    except Exception:
        pass
    return 44 * 1024 * 1024


def _choose_block_b(batch, k, itemsize, vmem_limit_bytes):
    kpad = _round_up(k, 128)                       # lane-padded VMEM layout width
    # Per-row VMEM cost: 2 double-buffered input copies (native dtype) plus
    # ~6 f32-wide in-kernel temporaries (cast copy, shifted, exp, iota, selects).
    per_row = kpad * (2 * itemsize + 6 * 4)
    budget = int(vmem_limit_bytes * 0.6)           # headroom for output / compiler scratch
    tb = max(8, (budget // per_row) // 8 * 8)      # bytes-based cap, multiple of 8
    tb = min(tb, _round_up(batch, 8))
    if batch >= 16:
        # Guarantee >= 2 grid steps so v7x megacore shards the batch axis.
        tb = min(tb, _round_up(-(-batch // 2), 8))
    return int(tb)


def cross_entropy_label_smooth(logits, targets, *, num_classes, epsilon=0.1, block_b=None):
    """logits: (B, K) float (any dtype); targets: (B,) int class indices. Scalar f32 loss."""
    b, k = logits.shape
    assert k == num_classes

    vmem_limit = _scoped_vmem_limit_bytes()
    if block_b is None:
        block_b = _choose_block_b(b, k, logits.dtype.itemsize, vmem_limit)
    block_b = int(block_b)
    num_blocks = (b + block_b - 1) // block_b
    mask_rows = (b % block_b) != 0

    t = targets.astype(jnp.int32).reshape(b, 1)

    kernel = functools.partial(
        _ce_label_smooth_kernel,
        epsilon=float(epsilon), num_classes=int(num_classes),
        batch=int(b), block_b=block_b, mask_rows=bool(mask_rows))

    partials = pl.pallas_call(
        kernel,
        out_shape=jax.ShapeDtypeStruct((num_blocks, 1, 128), jnp.float32),
        grid_spec=pl.GridSpec(
            grid=(num_blocks,),
            in_specs=[
                # Last dim == full K (legal even when K % 128 != 0); no HBM pad copy.
                pl.BlockSpec((block_b, k), lambda i: (i, 0)),
                pl.BlockSpec((block_b, 1), lambda i: (i, 0)),
            ],
            out_specs=pl.BlockSpec((1, 1, 128), lambda i: (i, 0, 0)),
        ),
        compiler_params=pltpu.CompilerParams(
            dimension_semantics=("parallel",),
            vmem_limit_bytes=int(vmem_limit)),
    )(logits, t)

    # Only lane 0 of each block is non-zero; divide by the *global* batch size.
    return jnp.sum(partials) / jnp.float32(b)


def _reference(logits, targets, num_classes, epsilon=0.1):
    log_probs = jax.nn.log_softmax(logits.astype(jnp.float32), axis=1)
    one_hot = jax.nn.one_hot(targets, num_classes, dtype=jnp.float32)
    smooth = (1.0 - epsilon) * one_hot + epsilon / num_classes
    return (-smooth * log_probs).mean(axis=0).sum()


if __name__ == "__main__":
    key = jax.random.PRNGKey(0)
    k1, k2, k3, k4, k5, k6 = jax.random.split(key, 6)

    # Small demo consistent with the module: (batch, num_classes), single block.
    batch, num_classes = 8, 16
    logits = jax.random.normal(k1, (batch, num_classes), dtype=jnp.float32)
    targets = jax.random.randint(k2, (batch,), 0, num_classes, dtype=jnp.int32)
    loss = cross_entropy_label_smooth(logits, targets, num_classes=num_classes, epsilon=0.1)
    jax.block_until_ready(loss)
    ref = _reference(logits, targets, num_classes, epsilon=0.1)
    assert jnp.allclose(loss, ref, atol=1e-5, rtol=1e-5), (loss, ref)

    # Multi-block grid with a ragged last block (B % block_b != 0) and K % 128 != 0,
    # exercising the no-pad read path + row masking.
    batch2, num_classes2 = 20, 200
    logits2 = jax.random.normal(k3, (batch2, num_classes2), dtype=jnp.float32)
    targets2 = jax.random.randint(k4, (batch2,), 0, num_classes2, dtype=jnp.int32)
    loss2 = cross_entropy_label_smooth(logits2, targets2, num_classes=num_classes2,
                                       epsilon=0.1, block_b=8)
    jax.block_until_ready(loss2)
    ref2 = _reference(logits2, targets2, num_classes2, epsilon=0.1)
    assert jnp.allclose(loss2, ref2, atol=1e-5, rtol=1e-5), (loss2, ref2)

    # bf16 logits: native-dtype DMA, in-kernel cast to f32, auto block selection.
    batch3, num_classes3 = 12, 130
    logits3 = jax.random.normal(k5, (batch3, num_classes3), dtype=jnp.float32).astype(jnp.bfloat16)
    targets3 = jax.random.randint(k6, (batch3,), 0, num_classes3, dtype=jnp.int32)
    loss3 = cross_entropy_label_smooth(logits3, targets3, num_classes=num_classes3, epsilon=0.1)
    jax.block_until_ready(loss3)
    ref3 = _reference(logits3, targets3, num_classes3, epsilon=0.1)
    assert jnp.allclose(loss3, ref3, atol=1e-4, rtol=1e-4), (loss3, ref3)

    print("KERNEL_OK")
</pallas_src>

<mosaic_0001>
module attributes {stable_mosaic.version = 11 : i64} {
  func.func @_ce_label_smooth_kernel(%arg0: i32, %arg1: memref<8x16xf32, #tpu.memory_space<vmem>>, %arg2: memref<8x1xi32, #tpu.memory_space<vmem>>, %arg3: memref<1x1x128xf32, #tpu.memory_space<vmem>>) attributes {dimension_semantics = [#tpu.dimension_semantics<parallel>], iteration_bounds = array<i64: 1>, scalar_prefetch = 0 : i64, scratch_operands = 0 : i64, tpu.core_type = #tpu.core_type<tc>, window_params = [{transform_indices = @transform_0, window_bounds = array<i64: 8, 16>}, {transform_indices = @transform_1, window_bounds = array<i64: 8, 1>}, {transform_indices = @transform_2, window_bounds = array<i64: 1, 1, 128>}]} {
    %c0 = arith.constant 0 : index
    %c0_0 = arith.constant 0 : index
    %0 = vector.load %arg1[%c0, %c0_0] : memref<8x16xf32, #tpu.memory_space<vmem>>, vector<8x16xf32>
    %cst = arith.constant dense<0xFF800000> : vector<8xf32>
    %1 = vector.multi_reduction <maximumf>, %0, %cst [1] : vector<8x16xf32> to vector<8xf32>
    %2 = vector.shape_cast %1 : vector<8xf32> to vector<8x1xf32>
    %3 = vector.broadcast %2 : vector<8x1xf32> to vector<8x16xf32>
    %4 = arith.subf %0, %3 : vector<8x16xf32>
    %5 = math.exp %4 : vector<8x16xf32>
    %cst_1 = arith.constant dense<0.000000e+00> : vector<8xf32>
    %6 = vector.multi_reduction <add>, %5, %cst_1 [1] : vector<8x16xf32> to vector<8xf32>
    %7 = vector.shape_cast %6 : vector<8xf32> to vector<8x1xf32>
    %8 = math.log %7 : vector<8x1xf32>
    %c0_2 = arith.constant 0 : index
    %c0_3 = arith.constant 0 : index
    %9 = vector.load %arg2[%c0_2, %c0_3] : memref<8x1xi32, #tpu.memory_space<vmem>>, vector<8x1xi32>
    %10 = tpu.iota {dimensions = array<i32: 1>} : vector<8x16xi32>
    %11 = vector.broadcast %9 : vector<8x1xi32> to vector<8x16xi32>
    %12 = arith.cmpi eq, %10, %11 : vector<8x16xi32>
    %cst_4 = arith.constant 0.000000e+00 : f32
    %13 = vector.broadcast %cst_4 : f32 to vector<8x16xf32>
    %14 = arith.select %12, %4, %13 : vector<8x16xi1>, vector<8x16xf32>
    %cst_5 = arith.constant dense<0.000000e+00> : vector<8xf32>
    %15 = vector.multi_reduction <add>, %14, %cst_5 [1] : vector<8x16xf32> to vector<8xf32>
    %16 = vector.shape_cast %15 : vector<8xf32> to vector<8x1xf32>
    %cst_6 = arith.constant dense<0.000000e+00> : vector<8xf32>
    %17 = vector.multi_reduction <add>, %4, %cst_6 [1] : vector<8x16xf32> to vector<8xf32>
    %18 = vector.shape_cast %17 : vector<8xf32> to vector<8x1xf32>
    %19 = arith.subf %16, %8 : vector<8x1xf32>
    %cst_7 = arith.constant 1.600000e+01 : f32
    %20 = vector.broadcast %cst_7 : f32 to vector<8x1xf32>
    %21 = arith.mulf %20, %8 : vector<8x1xf32>
    %22 = arith.subf %18, %21 : vector<8x1xf32>
    %cst_8 = arith.constant -0.899999976 : f32
    %23 = vector.broadcast %cst_8 : f32 to vector<8x1xf32>
    %24 = arith.mulf %23, %19 : vector<8x1xf32>
    %cst_9 = arith.constant 6.250000e-03 : f32
    %25 = vector.broadcast %cst_9 : f32 to vector<8x1xf32>
    %26 = arith.mulf %25, %22 : vector<8x1xf32>
    %27 = arith.subf %24, %26 : vector<8x1xf32>
    %28 = vector.shape_cast %27 : vector<8x1xf32> to vector<1x8x1xf32>
    %cst_10 = arith.constant dense<0.000000e+00> : vector<1xf32>
    %29 = vector.multi_reduction <add>, %28, %cst_10 [1, 2] : vector<1x8x1xf32> to vector<1xf32>
    %30 = vector.shape_cast %29 : vector<1xf32> to vector<1x1x1xf32>
    %31 = vector.extract %30[0, 0, 0] : f32 from vector<1x1x1xf32>
    %32 = tpu.iota {dimensions = array<i32: 2>} : vector<1x1x128xi32>
    %c0_i32 = arith.constant 0 : i32
    %33 = vector.broadcast %c0_i32 : i32 to vector<1x1x128xi32>
    %34 = arith.cmpi eq, %32, %33 : vector<1x1x128xi32>
    %cst_11 = arith.constant 0.000000e+00 : f32
    %35 = vector.broadcast %31 : f32 to vector<1x1x128xf32>
    %36 = vector.broadcast %cst_11 : f32 to vector<1x1x128xf32>
    %37 = arith.select %34, %35, %36 : vector<1x1x128xi1>, vector<1x1x128xf32>
    %c0_12 = arith.constant 0 : index
    %c0_13 = arith.constant 0 : index
    %c0_14 = arith.constant 0 : index
    %38 = vector.load %arg3[%c0_12, %c0_13, %c0_14] : memref<1x1x128xf32, #tpu.memory_space<vmem>>, vector<1x1x128xf32>
    tpu.vector_store %arg3[%c0_12, %c0_13, %c0_14], %37 {strides = array<i32>} : memref<1x1x128xf32, #tpu.memory_space<vmem>>, vector<1x1x128xf32>,
    return
  }
  func.func @transform_0(%arg0: i32) -> (i32, i32) {
    %c0_i32 = arith.constant 0 : i32
    %c0_i32_0 = arith.constant 0 : i32
    return %arg0, %c0_i32 : i32, i32
  }
  func.func @transform_1(%arg0: i32) -> (i32, i32) {
    %c0_i32 = arith.constant 0 : i32
    %c0_i32_0 = arith.constant 0 : i32
    return %arg0, %c0_i32 : i32, i32
  }
  func.func @transform_2(%arg0: i32) -> (i32, i32, i32) {
    %c0_i32 = arith.constant 0 : i32
    %c0_i32_0 = arith.constant 0 : i32
    %c0_i32_1 = arith.constant 0 : i32
    return %arg0, %c0_i32, %c0_i32_0 : i32, i32, i32
  }
}

</mosaic_0001>

<llo_original>
// kernel: tpu_custom_call.1
$region0: #{tpu_custom_call.1}
  #allocation0 [shape = 'u32[]', space=smem, size = 0x4, offset = 0x4, fixed_abs, tag = 'smem constant byte address 0x4 - core index']
  #allocation1 [shape = 'u32[144,128]{1,0:T(1,128)}', space=vmem, size = 0x12000, scoped, tag = 'internal scratch']
  %s0 = inlined_call_operand.vmem [shape: f32[8,16], index: 0, kind: input, shape index: {}]
  %s1 = inlined_call_operand.vmem [shape: s32[8,1], index: 1, kind: input, shape index: {}]
  %s2 = inlined_call_operand.hbm [shape: f32[1,1,128], index: 2, kind: output, shape index: {}]
  %s3 = sld [smem:[#allocation0]]
  $region18: #{tpu_custom_call.1} parent=0
    _
  %s5 = ssub.s32 1, %s3
  %s6 = scalar_select 0, %s5, %s3
  $region1: #{tpu_custom_call.1} parent=0
    #allocation2 [shape = 'u8[512]{0}', space=vmem, size = 0x400, scoped, tag = 'output window, operand 0, single buffered']
    #allocation3 [shape = 's32[1]{0}', space=sflag, size = 0x4, scoped, tag = 'scoped memory for tpu_custom_call.1']
    %7 = vsyncpa [#allocation3], 0
    // Predicated region
    $region2: #{tpu_custom_call.1} parent=1 // pred_check
      _
    $region3: #{tpu_custom_call.1} parent=1 // pred_check_branch
      %9 = sbr.rel (0) target = $region5
    $region4: #{tpu_custom_call.1} parent=1 // pred_region
      _
    $region5: #{tpu_custom_call.1} parent=1 // pred_fallthru
      _
    // Predicated region
    $region6: #{tpu_custom_call.1} parent=1 // pred_check
      _
    $region7: #{tpu_custom_call.1} parent=1 // pred_check_branch
      %11 = sbr.rel (0) target = $region9
    $region8: #{tpu_custom_call.1} parent=1 // pred_region
      _
    $region9: #{tpu_custom_call.1} parent=1 // pred_fallthru
      _
    %v12 = vld [vmem:[%s0] sm:$0xff]
    %vm13 = vcmask 130048
    %v14 = vsel %vm13, %v12, -inf
    %15 = vmax.xlane.f32.xlu0 %v14
    %v16 = vpop.xlane.xlu0 %15
    %v17 = vsub.f32 %v12, %v16
    %v18 = vmul.f32 %v17, 1.442695
    %v19 = vpow.pop %v18
    %v20 = vsel %vm13, %v19, 0.0
    %21 = vadd.xlane.f32.xlu0 %v20
    %v22 = vpop.xlane.xlu0 %21
    %v23 = vlog2.pop %v22
    %v24 = vmul.f32 %v23, 0.6931472
    %v25 = vld [vmem:[%s1] sm:$0xff]
    %v26 = vlaneseq
    %v27 = vand.u32 %v26, 127
    %28 = vset.pattern.permute.xlu0 0
    %29 = vperm.xlu0 %28, %v25
    %v30 = vpop.permute.xlu0 %29
    %vm31 = vcmp.eq.s32.totalorder %v27, %v30
    %v32 = vsel %vm31, %v17, 0.0
    %v33 = vsel %vm13, %v32, 0.0
    %34 = vadd.xlane.f32.xlu0 %v33
    %v35 = vpop.xlane.xlu0 %34
    %v36 = vsel %vm13, %v17, 0.0
    %37 = vadd.xlane.f32.xlu0 %v36
    %v38 = vpop.xlane.xlu0 %37
    %v39 = vsub.f32 %v35, %v24
    %v40 = vmul.f32 %v24, 16.0
    %v41 = vsub.f32 %v38, %v40
    %v42 = vmul.f32 %v39, -0.9
    %v43 = vmul.f32 %v41, 0.00625
    %v44 = vsub.f32 %v42, %v43
    %vm45 = vcmask 7168
    %v46 = vsel %vm45, %v44, 0.0
    %47 = vadd.xlane.f32.xlu0 %v46
    %v48 = vpop.xlane.xlu0 %47
    %v49 = vrot.slane %v48, 4
    %v50 = vadd.f32 %v48, %v49
    %v51 = vrot.slane %v50, 2
    %v52 = vadd.f32 %v50, %v51
    %v53 = vrot.slane %v52, 1
    %v54 = vadd.f32 %v52, %v53
    %s55 = vtos %v54
    %vm56 = vcmp.eq.s32.totalorder %v27, 0
    %v57 = vstv %s55
    %v58 = vsel %vm56, %v57, 0.0
    %59 = vst [vmem:[#allocation2] sm:$0x1] %v58
    // Predicated region
    $region10: #{tpu_custom_call.1} parent=1 // pred_check
      _
    $region11: #{tpu_custom_call.1} parent=1 // pred_check_branch
      %61 = sbr.rel (0) target = $region13
    $region12: #{tpu_custom_call.1} parent=1 // pred_region
      %s63 = ssub.s32 16, 16
      %64 = vsyncadd [#allocation3], %s63
      %s66 = sshll.u32 [#allocation2], 4
      %s67 = int_to_ptr.vmem [resolvable:$true] %s66
      %69 = dma.vmem_to_hbm [thread:$0]  %s67, 16, %s2, [#allocation3]
    $region13: #{tpu_custom_call.1} parent=1 // pred_fallthru
      _
    // Predicated region
    $region14: #{tpu_custom_call.1} parent=1 // pred_check
      _
    $region15: #{tpu_custom_call.1} parent=1 // pred_check_branch
      %71 = sbr.rel (0) target = $region17
    $region16: #{tpu_custom_call.1} parent=1 // pred_region
      %72 = dma.done [#allocation3], 16
    $region17: #{tpu_custom_call.1} parent=1 // pred_fallthru
      _
    %73 = vsyncpa [#allocation3], 1

</llo_original>
